<compile_context>
chip_gen: v7x
topology: tpu7x:2x2x1
jax: 0.10.0
libtpu: 0.0.40
codegen_flags: <defaults>
</compile_context>

<pallas_src>
import jax
import jax.numpy as jnp
import numpy as np
from jax.experimental import pallas as pl
from jax.experimental.pallas import tpu as pltpu


# ----------------------------------------------------------------------------
# Kernel: image preprocessing
#   out[b, c, h, w] = image[b, 2 - c, w, h]
# One grid step per batch; whole (3, W, H) slab resident in VMEM.
# ----------------------------------------------------------------------------
def _preprocess_image_kernel(x_ref, o_ref):
    # x_ref: (3, W, H) per-batch slab; o_ref: (3, H, W).
    # BGR -> RGB flip + per-channel W<->H transpose, all on-chip (XLU).
    for c in range(3):  # static unroll, C == 3
        o_ref[c, :, :] = x_ref[2 - c, :, :].T


def preprocess_image(image):
    B, C, W, H = image.shape
    assert C == 3, "BGR->RGB flip assumes 3 channels"
    return pl.pallas_call(
        _preprocess_image_kernel,
        out_shape=jax.ShapeDtypeStruct((B, C, H, W), image.dtype),
        grid=(B,),
        in_specs=[
            pl.BlockSpec(
                (pl.Squeezed(), C, W, H),
                lambda b: (b, 0, 0, 0),
            )
        ],
        out_specs=pl.BlockSpec(
            (pl.Squeezed(), C, H, W),
            lambda b: (b, 0, 0, 0),
        ),
        compiler_params=pltpu.CompilerParams(
            # Batch axis is fully independent -> megacore sharding on v7x.
            dimension_semantics=("parallel",)
        ),
    )(image)


# ----------------------------------------------------------------------------
# Critic.forward equivalent
# ----------------------------------------------------------------------------
def critic_forward(image, prompt, mask):
    """Returns ((all_masks, all_scores), intermediates).

    The reference forward returns ([], []) — it never appends to the lists —
    so the observable tensor compute is the preprocessing implemented here.
    """
    del mask  # unused by the reference forward as well
    all_masks, all_scores = [], []

    # Pallas kernel: BGR->RGB flip + (W,H)->(H,W) transpose, NCHW output.
    rgb_nchw = preprocess_image(image)

    # Prompt scaling kept in plain JAX per perf review: the tensor is ~80 B,
    # a dedicated pallas_call launch would be pure overhead.
    scaled_prompt = prompt * jnp.asarray(240.0, prompt.dtype)

    point_labels = jnp.ones((prompt.shape[1],), dtype=jnp.int32)

    # TODO(synk): SAM ViT-B predictor (sam_model_registry['vit_b'] from a .pth
    # checkpoint + SammedPredictor.set_image/.predict) has no self-contained
    # Pallas equivalent; the reference forward discards its outputs anyway.
    return (all_masks, all_scores), (rgb_nchw, scaled_prompt, point_labels)


if __name__ == "__main__":
    key = jax.random.PRNGKey(0)
    k_img, k_prm, k_msk = jax.random.split(key, 3)

    B, C, W, H = 2, 3, 128, 128   # small, (8,128)-aligned spatial slab
    N_POINTS = 5

    image = jax.random.uniform(k_img, (B, C, W, H), dtype=jnp.float32)
    prompt = jax.random.uniform(k_prm, (B, N_POINTS, 2), dtype=jnp.float32)
    mask = jax.random.uniform(k_msk, (B, H, W), dtype=jnp.float32)

    (all_masks, all_scores), (rgb_nchw, scaled_prompt, point_labels) = critic_forward(
        image, prompt, mask
    )
    jax.block_until_ready((rgb_nchw, scaled_prompt, point_labels))

    # Reference check against plain-JAX semantics of the torch preprocessing.
    ref_img = jnp.transpose(image[:, ::-1, :, :], (0, 1, 3, 2))  # [b,c,h,w]=img[b,2-c,w,h]
    ref_prm = prompt * 240.0
    assert rgb_nchw.shape == (B, C, H, W)
    assert np.allclose(np.asarray(rgb_nchw), np.asarray(ref_img), atol=1e-6)
    assert np.allclose(np.asarray(scaled_prompt), np.asarray(ref_prm), atol=1e-4)
    assert all_masks == [] and all_scores == []

    print("KERNEL_OK")
</pallas_src>

<mosaic_0001>
module attributes {stable_mosaic.version = 11 : i64} {
  func.func @_preprocess_image_kernel(%arg0: i32, %arg1: memref<1x3x128x128xf32, #tpu.memory_space<vmem>>, %arg2: memref<1x3x128x128xf32, #tpu.memory_space<vmem>>) attributes {dimension_semantics = [#tpu.dimension_semantics<parallel>], iteration_bounds = array<i64: 2>, scalar_prefetch = 0 : i64, scratch_operands = 0 : i64, tpu.core_type = #tpu.core_type<tc>, window_params = [{transform_indices = @transform_0, window_bounds = array<i64: 1, 3, 128, 128>}, {transform_indices = @transform_1, window_bounds = array<i64: 1, 3, 128, 128>}]} {
    %c0 = arith.constant 0 : index
    %c2 = arith.constant 2 : index
    %c0_0 = arith.constant 0 : index
    %c0_1 = arith.constant 0 : index
    %0 = vector.load %arg1[%c0, %c2, %c0_0, %c0_1] : memref<1x3x128x128xf32, #tpu.memory_space<vmem>>, vector<1x1x128x128xf32>
    %1 = vector.shape_cast %0 : vector<1x1x128x128xf32> to vector<128x128xf32>
    %2 = tpu.transpose %1, [1, 0] : vector<128x128xf32> -> vector<128x128xf32>
    %c0_2 = arith.constant 0 : index
    %c0_3 = arith.constant 0 : index
    %c0_4 = arith.constant 0 : index
    %c0_5 = arith.constant 0 : index
    %3 = vector.load %arg2[%c0_2, %c0_3, %c0_4, %c0_5] : memref<1x3x128x128xf32, #tpu.memory_space<vmem>>, vector<1x1x128x128xf32>
    %4 = vector.shape_cast %3 : vector<1x1x128x128xf32> to vector<128x128xf32>
    %5 = vector.shape_cast %2 : vector<128x128xf32> to vector<1x1x128x128xf32>
    tpu.vector_store %arg2[%c0_2, %c0_3, %c0_4, %c0_5], %5 {strides = array<i32>} : memref<1x3x128x128xf32, #tpu.memory_space<vmem>>, vector<1x1x128x128xf32>,
    %c0_6 = arith.constant 0 : index
    %c1 = arith.constant 1 : index
    %c0_7 = arith.constant 0 : index
    %c0_8 = arith.constant 0 : index
    %6 = vector.load %arg1[%c0_6, %c1, %c0_7, %c0_8] : memref<1x3x128x128xf32, #tpu.memory_space<vmem>>, vector<1x1x128x128xf32>
    %7 = vector.shape_cast %6 : vector<1x1x128x128xf32> to vector<128x128xf32>
    %8 = tpu.transpose %7, [1, 0] : vector<128x128xf32> -> vector<128x128xf32>
    %c0_9 = arith.constant 0 : index
    %c1_10 = arith.constant 1 : index
    %c0_11 = arith.constant 0 : index
    %c0_12 = arith.constant 0 : index
    %9 = vector.load %arg2[%c0_9, %c1_10, %c0_11, %c0_12] : memref<1x3x128x128xf32, #tpu.memory_space<vmem>>, vector<1x1x128x128xf32>
    %10 = vector.shape_cast %9 : vector<1x1x128x128xf32> to vector<128x128xf32>
    %11 = vector.shape_cast %8 : vector<128x128xf32> to vector<1x1x128x128xf32>
    tpu.vector_store %arg2[%c0_9, %c1_10, %c0_11, %c0_12], %11 {strides = array<i32>} : memref<1x3x128x128xf32, #tpu.memory_space<vmem>>, vector<1x1x128x128xf32>,
    %c0_13 = arith.constant 0 : index
    %c0_14 = arith.constant 0 : index
    %c0_15 = arith.constant 0 : index
    %c0_16 = arith.constant 0 : index
    %12 = vector.load %arg1[%c0_13, %c0_14, %c0_15, %c0_16] : memref<1x3x128x128xf32, #tpu.memory_space<vmem>>, vector<1x1x128x128xf32>
    %13 = vector.shape_cast %12 : vector<1x1x128x128xf32> to vector<128x128xf32>
    %14 = tpu.transpose %13, [1, 0] : vector<128x128xf32> -> vector<128x128xf32>
    %c0_17 = arith.constant 0 : index
    %c2_18 = arith.constant 2 : index
    %c0_19 = arith.constant 0 : index
    %c0_20 = arith.constant 0 : index
    %15 = vector.load %arg2[%c0_17, %c2_18, %c0_19, %c0_20] : memref<1x3x128x128xf32, #tpu.memory_space<vmem>>, vector<1x1x128x128xf32>
    %16 = vector.shape_cast %15 : vector<1x1x128x128xf32> to vector<128x128xf32>
    %17 = vector.shape_cast %14 : vector<128x128xf32> to vector<1x1x128x128xf32>
    tpu.vector_store %arg2[%c0_17, %c2_18, %c0_19, %c0_20], %17 {strides = array<i32>} : memref<1x3x128x128xf32, #tpu.memory_space<vmem>>, vector<1x1x128x128xf32>,
    return
  }
  func.func @transform_0(%arg0: i32) -> (i32, i32, i32, i32) {
    %c0_i32 = arith.constant 0 : i32
    %c0_i32_0 = arith.constant 0 : i32
    %c0_i32_1 = arith.constant 0 : i32
    %c0_i32_2 = arith.constant 0 : i32
    return %arg0, %c0_i32, %c0_i32_0, %c0_i32_1 : i32, i32, i32, i32
  }
  func.func @transform_1(%arg0: i32) -> (i32, i32, i32, i32) {
    %c0_i32 = arith.constant 0 : i32
    %c0_i32_0 = arith.constant 0 : i32
    %c0_i32_1 = arith.constant 0 : i32
    %c0_i32_2 = arith.constant 0 : i32
    return %arg0, %c0_i32, %c0_i32_0, %c0_i32_1 : i32, i32, i32, i32
  }
}

</mosaic_0001>

<llo_original>
// kernel: tpu_custom_call.1
$region0: #{tpu_custom_call.1}
  #allocation0 [shape = 'u32[]', space=smem, size = 0x4, offset = 0x4, fixed_abs, tag = 'smem constant byte address 0x4 - core index']
  #allocation1 [shape = 'u32[144,128]{1,0:T(1,128)}', space=vmem, size = 0x12000, scoped, tag = 'internal scratch']
  %s0 = inlined_call_operand.hbm [shape: f32[2,3,128,128], index: 0, kind: input, shape index: {}]
  %s1 = inlined_call_operand.hbm [shape: f32[2,3,128,128], index: 1, kind: output, shape index: {}]
  %s2 = sld [smem:[#allocation0]]
  $region41: #{tpu_custom_call.1} parent=0
    _
  %s4 = ssub.s32 1, %s2
  %s5 = scalar_select 0, %s4, %s2
  $region1: #{tpu_custom_call.1} parent=0
    #allocation2 [shape = 'u8[393216]{0}', space=vmem, size = 0x60000, scoped, tag = 'input window, operand 0']
    #allocation3 [shape = 's32[2]{0}', space=sflag, size = 0x8, scoped, tag = 'scoped memory for tpu_custom_call.1']
    #allocation4 [shape = 's32[2]{0}', space=sflag, size = 0x8, scoped, tag = 'scoped memory for tpu_custom_call.1']
    #allocation5 [shape = 'u8[393216]{0}', space=vmem, size = 0x60000, scoped, tag = 'output window, operand 0']
    %6 = vsyncpa [#allocation3], 0
    %s7 = scalar_lea.sflag [#allocation3], 1
    %8 = vsyncpa %s7, 0
    %9 = vsyncpa [#allocation4], 0
    %s10 = scalar_lea.sflag [#allocation4], 1
    %11 = vsyncpa %s10, 0
    loop: start=0, step=1, limit=4
    $region2: #{tpu_custom_call.1} parent=1 // loop_pre_header
      _
    $region3: #{tpu_custom_call.1} parent=1 // loop_header
      %s13 = sphi 0, %s17
      %p14 = scmp.ge.s32.totalorder %s13, 4
      %s23 = sphi 0, %s25
      %s26 = sphi 0, %s23
      %s27 = sphi 0, %s26
      %s43 = sphi 0, %s27
      %s49 = sphi 0, %s51
      %s52 = sphi 0, %s49
      %s53 = sphi 0, %s52
      %s69 = sphi 0, %s53
    $region4: #{tpu_custom_call.1} parent=1 // loop_header_branch
      %16 = sbr.rel (%p14) target = $region8
    $region5: #{tpu_custom_call.1} parent=1 // loop_body
      %s18 = ssub.s32 %s13, 1
      %s19 = ssub.s32 %s13, 2
      %s20 = sadd.s32 %s13, 1
      %s21 = ssub.s32 %s13, %s20
      %p22 = scmp.eq.s32.totalorder %s21, 0
      %s24 = sadd.s32 %s23, 1
      %s25 = scalar_select %p22, %s23, %s24
      %p28 = pneg %p22
      %p29 = scmp.eq.s32.totalorder %s13, 1
      %p30 = por %p28, %p29
      %p31 = scmp.ne.s32.totalorder %s23, %s26
      %p32 = scmp.eq.s32.totalorder %s13, 0
      %p33 = por %p31, %p32
      %p34 = scmp.ne.s32.totalorder %s23, %s26
      %p35 = scmp.eq.s32.totalorder %s18, 1
      %p36 = por %p34, %p35
      %p37 = scmp.ne.s32.totalorder %s26, %s27
      %p38 = scmp.eq.s32.totalorder %s18, 0
      %p39 = por %p37, %p38
      %p40 = scmp.ne.s32.totalorder %s26, %s27
      %p41 = scmp.eq.s32.totalorder %s19, 1
      %p42 = por %p40, %p41
      %p44 = scmp.ne.s32.totalorder %s27, %s43
      %p45 = scmp.eq.s32.totalorder %s19, 0
      %p46 = por %p44, %p45
      %s47 = ssub.s32 %s13, %s20
      %p48 = scmp.eq.s32.totalorder %s47, 0
      %s50 = sadd.s32 %s49, 1
      %s51 = scalar_select %p48, %s49, %s50
      %p54 = pneg %p48
      %p55 = scmp.eq.s32.totalorder %s13, 1
      %p56 = por %p54, %p55
      %p57 = scmp.ne.s32.totalorder %s49, %s52
      %p58 = scmp.eq.s32.totalorder %s13, 0
      %p59 = por %p57, %p58
      %p60 = scmp.ne.s32.totalorder %s49, %s52
      %p61 = scmp.eq.s32.totalorder %s18, 1
      %p62 = por %p60, %p61
      %p63 = scmp.ne.s32.totalorder %s52, %s53
      %p64 = scmp.eq.s32.totalorder %s18, 0
      %p65 = por %p63, %p64
      %p66 = scmp.ne.s32.totalorder %s52, %s53
      %p67 = scmp.eq.s32.totalorder %s19, 1
      %p68 = por %p66, %p67
      %p70 = scmp.ne.s32.totalorder %s53, %s69
      %p71 = scmp.eq.s32.totalorder %s19, 0
      %p72 = por %p70, %p71
      %p73 = scmp.le.s32.totalorder 1, %s13
      %p74 = scmp.lt.s32.totalorder %s13, 3
      %p75 = pnand %p73, %p74
      %p76 = pneg %p75
      // Predicated region
      $region9: #{tpu_custom_call.1} parent=5 // pred_check
        _
      $region10: #{tpu_custom_call.1} parent=5 // pred_check_branch
        %78 = sbr.rel (%p75) target = $region12
      $region11: #{tpu_custom_call.1} parent=5 // pred_region
        %s79 = ssub.s32 %s13, 1
      $region12: #{tpu_custom_call.1} parent=5 // pred_fallthru
        _
      %p80 = scmp.lt.s32.totalorder %s13, 2
      // Predicated region
      $region13: #{tpu_custom_call.1} parent=5 // pred_check
        %p81 = pneg %p80
      $region14: #{tpu_custom_call.1} parent=5 // pred_check_branch
        %83 = sbr.rel (%p81) target = $region16
      $region15: #{tpu_custom_call.1} parent=5 // pred_region
        // Predicated region
        $region17: #{tpu_custom_call.1} parent=15 // pred_check
          %p84 = pneg %p33
        $region18: #{tpu_custom_call.1} parent=15 // pred_check_branch
          %86 = sbr.rel (%p84) target = $region20
        $region19: #{tpu_custom_call.1} parent=15 // pred_region
          %s87 = sand.u32 %s23, 1
          %s88 = scalar_lea.sflag [#allocation3], %s87
          %s89 = sand.u32 %s23, 1
          %s90 = smul.addr %s89, 384
          %s91 = scalar_lea.vmem [#allocation2], %s90
          %s93 = ssub.s32 6144, 6144
          %94 = vsyncadd %s88, %s93
          %s95 = smul.addr %s13, 48
          %s96 = smul.addr %s95, 128
          %s97 = scalar_lea.hbm %s0, %s96
          %s98 = sshll.u32 %s91, 4
          %s99 = int_to_ptr.vmem [resolvable:$true] %s98
          %104 = dma.hbm_to_vmem [thread:$0]  %s97, 6144, %s99, %s88, 128, 128, 8
        $region20: #{tpu_custom_call.1} parent=15 // pred_fallthru
          _
      $region16: #{tpu_custom_call.1} parent=5 // pred_fallthru
        _
      %p105 = scmp.le.s32.totalorder 1, %s13
      %p106 = scmp.lt.s32.totalorder %s13, 3
      %p107 = pnand %p105, %p106
      %p108 = pneg %p107
      // Predicated region
      $region21: #{tpu_custom_call.1} parent=5 // pred_check
        _
      $region22: #{tpu_custom_call.1} parent=5 // pred_check_branch
        %110 = sbr.rel (%p107) target = $region24
      $region23: #{tpu_custom_call.1} parent=5 // pred_region
        %s111 = ssub.s32 %s13, 1
        %s112 = sand.u32 %s26, 1
        %s113 = scalar_lea.sflag [#allocation3], %s112
        %s114 = sand.u32 %s26, 1
        %s115 = smul.addr %s114, 384
        %s116 = scalar_lea.vmem [#allocation2], %s115
        // Predicated region
        $region25: #{tpu_custom_call.1} parent=23 // pred_check
          %p117 = pneg %p39
        $region26: #{tpu_custom_call.1} parent=23 // pred_check_branch
          %119 = sbr.rel (%p117) target = $region28
        $region27: #{tpu_custom_call.1} parent=23 // pred_region
          %120 = dma.done %s113, 6144
        $region28: #{tpu_custom_call.1} parent=23 // pred_fallthru
          _
        %s121 = sand.u32 %s26, 1
        %s122 = scalar_lea.sflag [#allocation3], %s121
        %s123 = sand.u32 %s26, 1
        %s124 = smul.addr %s123, 384
        %s125 = scalar_lea.vmem [#allocation2], %s124
        %p126 = pneg %p39
        %p127 = pneg %p36
        %p128 = pneg %p65
        %p129 = pneg %p62
        %s130 = sand.u32 %s52, 1
        %s131 = scalar_lea.sflag [#allocation4], %s130
        %s132 = sand.u32 %s52, 1
        %s133 = smul.addr %s132, 384
        %s134 = scalar_lea.vmem [#allocation5], %s133
        %s135 = scalar_lea.vmem %s116, 256 [#allocation2]
        %v136 = vld [vmem:[%s135] sm:$0xff]
        %v137 = vld [vmem:[%s135 + $0x8] sm:$0xff]
        %v138 = vld [vmem:[%s135 + $0x10] sm:$0xff]
        %v139 = vld [vmem:[%s135 + $0x18] sm:$0xff]
        %v140 = vld [vmem:[%s135 + $0x20] sm:$0xff]
        %v141 = vld [vmem:[%s135 + $0x28] sm:$0xff]
        %v142 = vld [vmem:[%s135 + $0x30] sm:$0xff]
        %v143 = vld [vmem:[%s135 + $0x38] sm:$0xff]
        %v144 = vld [vmem:[%s135 + $0x40] sm:$0xff]
        %v145 = vld [vmem:[%s135 + $0x48] sm:$0xff]
        %v146 = vld [vmem:[%s135 + $0x50] sm:$0xff]
        %v147 = vld [vmem:[%s135 + $0x58] sm:$0xff]
        %v148 = vld [vmem:[%s135 + $0x60] sm:$0xff]
        %v149 = vld [vmem:[%s135 + $0x68] sm:$0xff]
        %v150 = vld [vmem:[%s135 + $0x70] sm:$0xff]
        %v151 = vld [vmem:[%s135 + $0x78] sm:$0xff]
        %152 = vxpose.xlu0.b32.start [1/16] %v136, 128
        %153 = vxpose.xlu0.b32.cont [2/16] %v137, 128
        %154 = vxpose.xlu0.b32.cont [3/16] %v138, 128
        %155 = vxpose.xlu0.b32.cont [4/16] %v139, 128
        %156 = vxpose.xlu0.b32.cont [5/16] %v140, 128
        %157 = vxpose.xlu0.b32.cont [6/16] %v141, 128
        %158 = vxpose.xlu0.b32.cont [7/16] %v142, 128
        %159 = vxpose.xlu0.b32.cont [8/16] %v143, 128
        %160 = vxpose.xlu0.b32.cont [9/16] %v144, 128
        %161 = vxpose.xlu0.b32.cont [10/16] %v145, 128
        %162 = vxpose.xlu0.b32.cont [11/16] %v146, 128
        %163 = vxpose.xlu0.b32.cont [12/16] %v147, 128
        %164 = vxpose.xlu0.b32.cont [13/16] %v148, 128
        %165 = vxpose.xlu0.b32.cont [14/16] %v149, 128
        %166 = vxpose.xlu0.b32.cont [15/16] %v150, 128
        %167 = vxpose.xlu0.b32.end [16/16] %v151, 128
        %v168 = vpop.trf.xlu0
        %v169 = vpop.trf.xlu0
        %v170 = vpop.trf.xlu0
        %v171 = vpop.trf.xlu0
        %v172 = vpop.trf.xlu0
        %v173 = vpop.trf.xlu0
        %v174 = vpop.trf.xlu0
        %v175 = vpop.trf.xlu0
        %v176 = vpop.trf.xlu0
        %v177 = vpop.trf.xlu0
        %v178 = vpop.trf.xlu0
        %v179 = vpop.trf.xlu0
        %v180 = vpop.trf.xlu0
        %v181 = vpop.trf.xlu0
        %v182 = vpop.trf.xlu0
        %v183 = vpop.trf.xlu0
        %184 = vst [vmem:[%s134] sm:$0xff] %v168
        %185 = vst [vmem:[%s134 + $0x8] sm:$0xff] %v169
        %186 = vst [vmem:[%s134 + $0x10] sm:$0xff] %v170
        %187 = vst [vmem:[%s134 + $0x18] sm:$0xff] %v171
        %188 = vst [vmem:[%s134 + $0x20] sm:$0xff] %v172
        %189 = vst [vmem:[%s134 + $0x28] sm:$0xff] %v173
        %190 = vst [vmem:[%s134 + $0x30] sm:$0xff] %v174
        %191 = vst [vmem:[%s134 + $0x38] sm:$0xff] %v175
        %192 = vst [vmem:[%s134 + $0x40] sm:$0xff] %v176
        %193 = vst [vmem:[%s134 + $0x48] sm:$0xff] %v177
        %194 = vst [vmem:[%s134 + $0x50] sm:$0xff] %v178
        %195 = vst [vmem:[%s134 + $0x58] sm:$0xff] %v179
        %196 = vst [vmem:[%s134 + $0x60] sm:$0xff] %v180
        %197 = vst [vmem:[%s134 + $0x68] sm:$0xff] %v181
        %198 = vst [vmem:[%s134 + $0x70] sm:$0xff] %v182
        %199 = vst [vmem:[%s134 + $0x78] sm:$0xff] %v183
        %s200 = scalar_lea.vmem %s116, 128 [#allocation2]
        %v201 = vld [vmem:[%s200] sm:$0xff]
        %v202 = vld [vmem:[%s200 + $0x8] sm:$0xff]
        %v203 = vld [vmem:[%s200 + $0x10] sm:$0xff]
        %v204 = vld [vmem:[%s200 + $0x18] sm:$0xff]
        %v205 = vld [vmem:[%s200 + $0x20] sm:$0xff]
        %v206 = vld [vmem:[%s200 + $0x28] sm:$0xff]
        %v207 = vld [vmem:[%s200 + $0x30] sm:$0xff]
        %v208 = vld [vmem:[%s200 + $0x38] sm:$0xff]
        %v209 = vld [vmem:[%s200 + $0x40] sm:$0xff]
        %v210 = vld [vmem:[%s200 + $0x48] sm:$0xff]
        %v211 = vld [vmem:[%s200 + $0x50] sm:$0xff]
        %v212 = vld [vmem:[%s200 + $0x58] sm:$0xff]
        %v213 = vld [vmem:[%s200 + $0x60] sm:$0xff]
        %v214 = vld [vmem:[%s200 + $0x68] sm:$0xff]
        %v215 = vld [vmem:[%s200 + $0x70] sm:$0xff]
        %v216 = vld [vmem:[%s200 + $0x78] sm:$0xff]
        %217 = vxpose.xlu0.b32.start [1/16] %v201, 128
        %218 = vxpose.xlu0.b32.cont [2/16] %v202, 128
        %219 = vxpose.xlu0.b32.cont [3/16] %v203, 128
        %220 = vxpose.xlu0.b32.cont [4/16] %v204, 128
        %221 = vxpose.xlu0.b32.cont [5/16] %v205, 128
        %222 = vxpose.xlu0.b32.cont [6/16] %v206, 128
        %223 = vxpose.xlu0.b32.cont [7/16] %v207, 128
        %224 = vxpose.xlu0.b32.cont [8/16] %v208, 128
        %225 = vxpose.xlu0.b32.cont [9/16] %v209, 128
        %226 = vxpose.xlu0.b32.cont [10/16] %v210, 128
        %227 = vxpose.xlu0.b32.cont [11/16] %v211, 128
        %228 = vxpose.xlu0.b32.cont [12/16] %v212, 128
        %229 = vxpose.xlu0.b32.cont [13/16] %v213, 128
        %230 = vxpose.xlu0.b32.cont [14/16] %v214, 128
        %231 = vxpose.xlu0.b32.cont [15/16] %v215, 128
        %232 = vxpose.xlu0.b32.end [16/16] %v216, 128
        %v233 = vpop.trf.xlu0
        %v234 = vpop.trf.xlu0
        %v235 = vpop.trf.xlu0
        %v236 = vpop.trf.xlu0
        %v237 = vpop.trf.xlu0
        %v238 = vpop.trf.xlu0
        %v239 = vpop.trf.xlu0
        %v240 = vpop.trf.xlu0
        %v241 = vpop.trf.xlu0
        %v242 = vpop.trf.xlu0
        %v243 = vpop.trf.xlu0
        %v244 = vpop.trf.xlu0
        %v245 = vpop.trf.xlu0
        %v246 = vpop.trf.xlu0
        %v247 = vpop.trf.xlu0
        %v248 = vpop.trf.xlu0
        %s249 = scalar_lea.vmem %s134, 128 [#allocation5]
        %250 = vst [vmem:[%s249] sm:$0xff] %v233
        %251 = vst [vmem:[%s249 + $0x8] sm:$0xff] %v234
        %252 = vst [vmem:[%s249 + $0x10] sm:$0xff] %v235
        %253 = vst [vmem:[%s249 + $0x18] sm:$0xff] %v236
        %254 = vst [vmem:[%s249 + $0x20] sm:$0xff] %v237
        %255 = vst [vmem:[%s249 + $0x28] sm:$0xff] %v238
        %256 = vst [vmem:[%s249 + $0x30] sm:$0xff] %v239
        %257 = vst [vmem:[%s249 + $0x38] sm:$0xff] %v240
        %258 = vst [vmem:[%s249 + $0x40] sm:$0xff] %v241
        %259 = vst [vmem:[%s249 + $0x48] sm:$0xff] %v242
        %260 = vst [vmem:[%s249 + $0x50] sm:$0xff] %v243
        %261 = vst [vmem:[%s249 + $0x58] sm:$0xff] %v244
        %262 = vst [vmem:[%s249 + $0x60] sm:$0xff] %v245
        %263 = vst [vmem:[%s249 + $0x68] sm:$0xff] %v246
        %264 = vst [vmem:[%s249 + $0x70] sm:$0xff] %v247
        %265 = vst [vmem:[%s249 + $0x78] sm:$0xff] %v248
        %v266 = vld [vmem:[%s116] sm:$0xff]
        %v267 = vld [vmem:[%s116 + $0x8] sm:$0xff]
        %v268 = vld [vmem:[%s116 + $0x10] sm:$0xff]
        %v269 = vld [vmem:[%s116 + $0x18] sm:$0xff]
        %v270 = vld [vmem:[%s116 + $0x20] sm:$0xff]
        %v271 = vld [vmem:[%s116 + $0x28] sm:$0xff]
        %v272 = vld [vmem:[%s116 + $0x30] sm:$0xff]
        %v273 = vld [vmem:[%s116 + $0x38] sm:$0xff]
        %v274 = vld [vmem:[%s116 + $0x40] sm:$0xff]
        %v275 = vld [vmem:[%s116 + $0x48] sm:$0xff]
        %v276 = vld [vmem:[%s116 + $0x50] sm:$0xff]
        %v277 = vld [vmem:[%s116 + $0x58] sm:$0xff]
        %v278 = vld [vmem:[%s116 + $0x60] sm:$0xff]
        %v279 = vld [vmem:[%s116 + $0x68] sm:$0xff]
        %v280 = vld [vmem:[%s116 + $0x70] sm:$0xff]
        %v281 = vld [vmem:[%s116 + $0x78] sm:$0xff]
        %282 = vxpose.xlu0.b32.start [1/16] %v266, 128
        %283 = vxpose.xlu0.b32.cont [2/16] %v267, 128
        %284 = vxpose.xlu0.b32.cont [3/16] %v268, 128
        %285 = vxpose.xlu0.b32.cont [4/16] %v269, 128
        %286 = vxpose.xlu0.b32.cont [5/16] %v270, 128
        %287 = vxpose.xlu0.b32.cont [6/16] %v271, 128
        %288 = vxpose.xlu0.b32.cont [7/16] %v272, 128
        %289 = vxpose.xlu0.b32.cont [8/16] %v273, 128
        %290 = vxpose.xlu0.b32.cont [9/16] %v274, 128
        %291 = vxpose.xlu0.b32.cont [10/16] %v275, 128
        %292 = vxpose.xlu0.b32.cont [11/16] %v276, 128
        %293 = vxpose.xlu0.b32.cont [12/16] %v277, 128
        %294 = vxpose.xlu0.b32.cont [13/16] %v278, 128
        %295 = vxpose.xlu0.b32.cont [14/16] %v279, 128
        %296 = vxpose.xlu0.b32.cont [15/16] %v280, 128
        %297 = vxpose.xlu0.b32.end [16/16] %v281, 128
        %v298 = vpop.trf.xlu0
        %v299 = vpop.trf.xlu0
        %v300 = vpop.trf.xlu0
        %v301 = vpop.trf.xlu0
        %v302 = vpop.trf.xlu0
        %v303 = vpop.trf.xlu0
        %v304 = vpop.trf.xlu0
        %v305 = vpop.trf.xlu0
        %v306 = vpop.trf.xlu0
        %v307 = vpop.trf.xlu0
        %v308 = vpop.trf.xlu0
        %v309 = vpop.trf.xlu0
        %v310 = vpop.trf.xlu0
        %v311 = vpop.trf.xlu0
        %v312 = vpop.trf.xlu0
        %v313 = vpop.trf.xlu0
        %s314 = scalar_lea.vmem %s134, 256 [#allocation5]
        %315 = vst [vmem:[%s314] sm:$0xff] %v298
        %316 = vst [vmem:[%s314 + $0x8] sm:$0xff] %v299
        %317 = vst [vmem:[%s314 + $0x10] sm:$0xff] %v300
        %318 = vst [vmem:[%s314 + $0x18] sm:$0xff] %v301
        %319 = vst [vmem:[%s314 + $0x20] sm:$0xff] %v302
        %320 = vst [vmem:[%s314 + $0x28] sm:$0xff] %v303
        %321 = vst [vmem:[%s314 + $0x30] sm:$0xff] %v304
        %322 = vst [vmem:[%s314 + $0x38] sm:$0xff] %v305
        %323 = vst [vmem:[%s314 + $0x40] sm:$0xff] %v306
        %324 = vst [vmem:[%s314 + $0x48] sm:$0xff] %v307
        %325 = vst [vmem:[%s314 + $0x50] sm:$0xff] %v308
        %326 = vst [vmem:[%s314 + $0x58] sm:$0xff] %v309
        %327 = vst [vmem:[%s314 + $0x60] sm:$0xff] %v310
        %328 = vst [vmem:[%s314 + $0x68] sm:$0xff] %v311
        %329 = vst [vmem:[%s314 + $0x70] sm:$0xff] %v312
        %330 = vst [vmem:[%s314 + $0x78] sm:$0xff] %v313
        %s331 = sand.u32 %s52, 1
        %s332 = scalar_lea.sflag [#allocation4], %s331
        %s333 = sand.u32 %s52, 1
        %s334 = smul.addr %s333, 384
        %s335 = scalar_lea.vmem [#allocation5], %s334
        // Predicated region
        $region29: #{tpu_custom_call.1} parent=23 // pred_check
          %p336 = pneg %p62
        $region30: #{tpu_custom_call.1} parent=23 // pred_check_branch
          %338 = sbr.rel (%p336) target = $region32
        $region31: #{tpu_custom_call.1} parent=23 // pred_region
          %s340 = ssub.s32 6144, 6144
          %341 = vsyncadd %s332, %s340
          %s342 = smul.addr %s18, 48
          %s343 = smul.addr %s342, 128
          %s344 = scalar_lea.hbm %s1, %s343
          %s345 = sshll.u32 %s335, 4
          %s346 = int_to_ptr.vmem [resolvable:$true] %s345
          %351 = dma.vmem_to_hbm [thread:$0]  %s346, 6144, %s344, %s332, 128, 128, 8
        $region32: #{tpu_custom_call.1} parent=23 // pred_fallthru
          _
      $region24: #{tpu_custom_call.1} parent=5 // pred_fallthru
        _
      %p352 = scmp.le.s32.totalorder 2, %s13
      // Predicated region
      $region33: #{tpu_custom_call.1} parent=5 // pred_check
        %p353 = pneg %p352
      $region34: #{tpu_custom_call.1} parent=5 // pred_check_branch
        %355 = sbr.rel (%p353) target = $region36
      $region35: #{tpu_custom_call.1} parent=5 // pred_region
        %s356 = ssub.s32 %s13, 2
        // Predicated region
        $region37: #{tpu_custom_call.1} parent=35 // pred_check
          %p357 = pneg %p68
        $region38: #{tpu_custom_call.1} parent=35 // pred_check_branch
          %359 = sbr.rel (%p357) target = $region40
        $region39: #{tpu_custom_call.1} parent=35 // pred_region
          %s360 = sand.u32 %s53, 1
          %s361 = scalar_lea.sflag [#allocation4], %s360
          %s362 = sand.u32 %s53, 1
          %s363 = smul.addr %s362, 384
          %s364 = scalar_lea.vmem [#allocation5], %s363
          %365 = dma.done %s361, 6144
        $region40: #{tpu_custom_call.1} parent=35 // pred_fallthru
          _
      $region36: #{tpu_custom_call.1} parent=5 // pred_fallthru
        _
    $region6: #{tpu_custom_call.1} parent=1 // loop_footer
      %s17 = sadd.s32 1, %s13
    $region7: #{tpu_custom_call.1} parent=1 // loop_footer_branch
      %12 = sbr.rel target = $region3
    $region8: #{tpu_custom_call.1} parent=1 // loop_exit
      _
    %366 = vsyncpa [#allocation3], 1
    %s367 = scalar_lea.sflag [#allocation3], 1
    %368 = vsyncpa %s367, 1
    %369 = vsyncpa [#allocation4], 1
    %s370 = scalar_lea.sflag [#allocation4], 1
    %371 = vsyncpa %s370, 1

</llo_original>
